<compile_context>
chip_gen: v7x
topology: tpu7x:2x2x1
jax: 0.10.0
libtpu: 0.0.40
codegen_flags: <defaults>
</compile_context>

<pallas_src>
import jax
import jax.numpy as jnp
from jax.experimental import pallas as pl
from jax.experimental.pallas import tpu as pltpu


def _attention_kernel(v_ref, hq_ref, w1v_ref, w2_ref, b2_ref, out_ref):
    """One grid step: TB batch rows, all K objects.

    v_ref   : [TB, K, Dv]  compute dtype (bf16)  image-region features
    hq_ref  : [TB, H]      f32, hoisted q-projection (q @ W1_q + b1)
    w1v_ref : [Dv, H]      compute dtype (bf16)  v-part of the fused FC weight
    w2_ref  : [1, H]       f32                   second Linear as a row vector
    b2_ref  : [1, 1]       f32 (SMEM scalar)
    out_ref : [TB, K]      f32 softmax weights (lane-dense; K on the lane axis)
    """
    TB, K, Dv = v_ref.shape
    H = w1v_ref.shape[1]

    # --- FCNet([D, H]), v-part: one (TB*K, Dv) x (Dv, H) MXU matmul, f32 accumulate ---
    v2d = v_ref[...].reshape(TB * K, Dv)
    hv = jnp.dot(v2d, w1v_ref[...], preferred_element_type=jnp.float32)      # [TB*K, H]
    # Add the K-invariant q-projection (b1 already folded in) and apply ReLU.
    hidden = jnp.maximum(hv.reshape(TB, K, H) + hq_ref[...][:, None, :], 0.0)  # [TB, K, H]

    # --- Linear(H, 1): VPU multiply + lane reduction (avoids an N=1 MXU matmul) ---
    logits = jnp.sum(hidden * w2_ref[...][None, :, :], axis=-1) + b2_ref[0, 0]  # [TB, K]

    # --- softmax over the K objects (torch dim 1) ---
    m = jnp.max(logits, axis=1, keepdims=True)
    e = jnp.exp(logits - m)
    denom = jnp.sum(e, axis=1, keepdims=True)
    # Exact f32 divide on a tiny [TB, K] tile: guarantees rows sum to 1 (the approximate
    # EUP reciprocal introduced ~1% systematic scaling error on the sum).
    out_ref[...] = (e / denom).astype(out_ref.dtype)


def _choose_batch_tile(B, K):
    """Pick TB so each grid step feeds the MXU ~>=512 LHS rows (bounded by the batch)."""
    if B <= 8:
        return B                       # one block covers the dim: no 8-alignment needed
    tb = -(-512 // K)                  # ceil(512 / K) target rows per step
    tb = ((tb + 7) // 8) * 8           # multiple of 8 (second-to-last block dim of hq/out)
    return min(tb, ((B + 7) // 8) * 8)


def attention_forward(v, q, params, *, compute_dtype=jnp.bfloat16):
    """v: [B, K, vdim] f32, q: [B, qdim] f32  ->  attention weights [B, K, 1] f32."""
    w1v, w1q, b1, w2, b2 = params            # [Dv,H], [Dq,H], [H], [1,H], [1,1]
    B, K, Dv = v.shape
    H = w1q.shape[1]

    # Hoisted, K-invariant q-projection: a single small [B,Dq]x[Dq,H] matmul in plain XLA.
    hq = q.astype(jnp.float32) @ w1q + b1[None, :]                 # [B, H] f32

    TB = _choose_batch_tile(B, K)
    Bp = ((B + TB - 1) // TB) * TB           # pad batch to a multiple of the tile
    v_in = v.astype(compute_dtype)
    if Bp != B:
        v_in = jnp.pad(v_in, ((0, Bp - B), (0, 0), (0, 0)))
        hq = jnp.pad(hq, ((0, Bp - B), (0, 0)))

    out = pl.pallas_call(
        _attention_kernel,
        out_shape=jax.ShapeDtypeStruct((Bp, K), jnp.float32),
        grid_spec=pltpu.PrefetchScalarGridSpec(
            num_scalar_prefetch=0,
            grid=(Bp // TB,),
            in_specs=[
                # activations: one (TB, K, Dv) slab per step (pipelined over batch tiles)
                pl.BlockSpec((TB, K, Dv), lambda b: (b, 0, 0)),
                pl.BlockSpec((TB, H), lambda b: (b, 0)),
                # weights: constant index_map -> stay resident across the grid.
                # TODO(synk): at production VQA sizes (Dv~2K, H~1K) add an H-tiling grid
                # axis / raise vmem_limit_bytes for v7x's 64 MiB VMEM; bf16 already halves it.
                pl.BlockSpec((Dv, H), lambda b: (0, 0)),
                pl.BlockSpec((1, H), lambda b: (0, 0)),
                # scalar second-layer bias in SMEM (no vreg-tile DMA for one element)
                pl.BlockSpec((1, 1), lambda b: (0, 0),
                             memory_space=pltpu.MemorySpace.SMEM),
            ],
            out_specs=pl.BlockSpec((TB, K), lambda b: (b, 0)),
        ),
        compiler_params=pltpu.CompilerParams(
            dimension_semantics=("parallel",)),   # megacore-shard batch tiles (v7x: 2 TCs)
    )(v_in, hq, w1v.astype(compute_dtype), w2, b2)

    return out[:B, :, None]                  # [B, K, 1] — matches the torch module output


def _weight_norm_eff(v_dir, g):
    # weight_norm(dim=None): W_eff = g * V / ||V||_F (scalar gain, Frobenius norm)
    return g * v_dir / jnp.sqrt(jnp.sum(v_dir * v_dir))


def init_params(key, v_dim, q_dim, num_hid):
    D = v_dim + q_dim
    k1, k2, k3, k4, k5, k6 = jax.random.split(key, 6)

    # Linear(D, num_hid): PyTorch-style uniform(-1/sqrt(D), 1/sqrt(D))
    lim1 = 1.0 / jnp.sqrt(D)
    v1 = jax.random.uniform(k1, (num_hid, D), jnp.float32, -lim1, lim1)
    g1 = 1.0 + 0.1 * jax.random.uniform(k2, (), jnp.float32)
    b1 = jax.random.uniform(k3, (num_hid,), jnp.float32, -lim1, lim1)
    w1_eff = _weight_norm_eff(v1, g1)                 # [H, D]

    # Linear(num_hid, 1)
    lim2 = 1.0 / jnp.sqrt(num_hid)
    v2 = jax.random.uniform(k4, (1, num_hid), jnp.float32, -lim2, lim2)
    g2 = 1.0 + 0.1 * jax.random.uniform(k5, (), jnp.float32)
    b2 = jax.random.uniform(k6, (1,), jnp.float32, -lim2, lim2)
    w2_eff = _weight_norm_eff(v2, g2)                 # [1, H]

    # Kernel layout: W1 split into its v / q column blocks (q part is hoisted) and
    # transposed so the kernel does row-major `x @ W`; W2 kept as a row vector for the
    # VPU mul-reduce; b2 as a (1,1) scalar for SMEM.
    w1v = w1_eff[:, :v_dim].T                         # [Dv, H]
    w1q = w1_eff[:, v_dim:].T                         # [Dq, H]
    return (w1v, w1q, b1, w2_eff, b2.reshape(1, 1))


def _reference(v, q, params, compute_dtype=jnp.bfloat16):
    """Pure-JAX reference with the same bf16-operand / f32-accumulate matmul precision."""
    w1v, w1q, b1, w2, b2 = params
    vb = v.astype(compute_dtype).astype(jnp.float32)
    w1vb = w1v.astype(compute_dtype).astype(jnp.float32)
    hq = q @ w1q + b1[None, :]                                        # [B, H]
    h = jnp.maximum(jnp.einsum('bkd,dh->bkh', vb, w1vb) + hq[:, None, :], 0.0)
    logits = jnp.sum(h * w2[None, :, :], axis=-1) + b2[0, 0]          # [B, K]
    return jax.nn.softmax(logits, axis=1)[:, :, None]                 # [B, K, 1]


if __name__ == "__main__":
    B, K, VDIM, QDIM, NUM_HID = 2, 8, 16, 16, 32

    key = jax.random.PRNGKey(0)
    kv, kq, kp = jax.random.split(key, 3)
    v = jax.random.normal(kv, (B, K, VDIM), jnp.float32)
    q = jax.random.normal(kq, (B, QDIM), jnp.float32)
    params = init_params(kp, VDIM, QDIM, NUM_HID)

    out = attention_forward(v, q, params)
    out = jax.block_until_ready(out)

    ref = _reference(v, q, params)
    assert out.shape == (B, K, 1)
    # bf16 matmul operands -> slightly looser-than-f32 tolerance vs the f32 reference
    assert jnp.allclose(out, ref, atol=2e-3, rtol=2e-3), "mismatch vs JAX reference"
    # exact f32 normalization inside the kernel -> rows sum to 1 to f32 rounding
    assert jnp.allclose(jnp.sum(out, axis=1), 1.0, atol=1e-4), "softmax rows must sum to 1"

    print("KERNEL_OK")
</pallas_src>

<mosaic_0001>
module attributes {stable_mosaic.version = 11 : i64} {
  func.func @_attention_kernel(%arg0: i32, %arg1: memref<2x8x16xbf16, #tpu.memory_space<vmem>>, %arg2: memref<2x32xf32, #tpu.memory_space<vmem>>, %arg3: memref<16x32xbf16, #tpu.memory_space<vmem>>, %arg4: memref<1x32xf32, #tpu.memory_space<vmem>>, %arg5: memref<1x1xf32, #tpu.memory_space<smem>>, %arg6: memref<2x8xf32, #tpu.memory_space<vmem>>) attributes {dimension_semantics = [#tpu.dimension_semantics<parallel>], iteration_bounds = array<i64: 1>, scalar_prefetch = 0 : i64, scratch_operands = 0 : i64, tpu.core_type = #tpu.core_type<tc>, window_params = [{transform_indices = @transform_0, window_bounds = array<i64: 2, 8, 16>}, {transform_indices = @transform_1, window_bounds = array<i64: 2, 32>}, {pipeline_mode = #tpu.pipeline_mode<synchronous>, transform_indices = @transform_2, window_bounds = array<i64: 16, 32>}, {pipeline_mode = #tpu.pipeline_mode<synchronous>, transform_indices = @transform_3, window_bounds = array<i64: 1, 32>}, {transform_indices = @transform_4, window_bounds = array<i64: 1, 1>}, {transform_indices = @transform_5, window_bounds = array<i64: 2, 8>}]} {
    %c0 = arith.constant 0 : index
    %c0_0 = arith.constant 0 : index
    %c0_1 = arith.constant 0 : index
    %0 = vector.load %arg1[%c0, %c0_0, %c0_1] : memref<2x8x16xbf16, #tpu.memory_space<vmem>>, vector<2x8x16xbf16>
    %1 = vector.shape_cast %0 : vector<2x8x16xbf16> to vector<16x16xbf16>
    %c0_2 = arith.constant 0 : index
    %c0_3 = arith.constant 0 : index
    %2 = vector.load %arg3[%c0_2, %c0_3] : memref<16x32xbf16, #tpu.memory_space<vmem>>, vector<16x32xbf16>
    %cst = arith.constant dense<0.000000e+00> : vector<16x32xf32>
    %3 = tpu.matmul %1, %2, %cst {dimension_numbers = #tpu.dot_dimension_numbers<[1], [0], [0], [1], [0, 0, 1, 1], [], []>} : vector<16x16xbf16>, vector<16x32xbf16>, vector<16x32xf32> -> vector<16x32xf32>
    %4 = vector.shape_cast %3 : vector<16x32xf32> to vector<2x8x32xf32>
    %c0_4 = arith.constant 0 : index
    %c0_5 = arith.constant 0 : index
    %5 = vector.load %arg2[%c0_4, %c0_5] : memref<2x32xf32, #tpu.memory_space<vmem>>, vector<2x32xf32>
    %6 = vector.shape_cast %5 : vector<2x32xf32> to vector<2x1x32xf32>
    %7 = vector.broadcast %6 : vector<2x1x32xf32> to vector<2x8x32xf32>
    %8 = arith.addf %4, %7 : vector<2x8x32xf32>
    %cst_6 = arith.constant 0.000000e+00 : f32
    %9 = vector.broadcast %cst_6 : f32 to vector<2x8x32xf32>
    %10 = arith.maximumf %8, %9 : vector<2x8x32xf32>
    %c0_7 = arith.constant 0 : index
    %c0_8 = arith.constant 0 : index
    %11 = vector.load %arg4[%c0_7, %c0_8] : memref<1x32xf32, #tpu.memory_space<vmem>>, vector<1x32xf32>
    %12 = vector.shape_cast %11 : vector<1x32xf32> to vector<1x1x32xf32>
    %13 = vector.broadcast %12 : vector<1x1x32xf32> to vector<2x8x32xf32>
    %14 = arith.mulf %10, %13 : vector<2x8x32xf32>
    %cst_9 = arith.constant dense<0.000000e+00> : vector<2x8xf32>
    %15 = vector.multi_reduction <add>, %14, %cst_9 [2] : vector<2x8x32xf32> to vector<2x8xf32>
    %c0_10 = arith.constant 0 : index
    %c0_11 = arith.constant 0 : index
    %16 = memref.load %arg5[%c0_10, %c0_11] : memref<1x1xf32, #tpu.memory_space<smem>>
    %17 = vector.broadcast %16 : f32 to vector<2x8xf32>
    %18 = arith.addf %15, %17 : vector<2x8xf32>
    %cst_12 = arith.constant dense<0xFF800000> : vector<2xf32>
    %19 = vector.multi_reduction <maximumf>, %18, %cst_12 [1] : vector<2x8xf32> to vector<2xf32>
    %20 = vector.shape_cast %19 : vector<2xf32> to vector<2x1xf32>
    %21 = vector.broadcast %20 : vector<2x1xf32> to vector<2x8xf32>
    %22 = arith.subf %18, %21 : vector<2x8xf32>
    %23 = math.exp %22 : vector<2x8xf32>
    %cst_13 = arith.constant dense<0.000000e+00> : vector<2xf32>
    %24 = vector.multi_reduction <add>, %23, %cst_13 [1] : vector<2x8xf32> to vector<2xf32>
    %25 = vector.shape_cast %24 : vector<2xf32> to vector<2x1xf32>
    %26 = vector.broadcast %25 : vector<2x1xf32> to vector<2x8xf32>
    %27 = arith.divf %23, %26 : vector<2x8xf32>
    %c0_14 = arith.constant 0 : index
    %c0_15 = arith.constant 0 : index
    %28 = vector.load %arg6[%c0_14, %c0_15] : memref<2x8xf32, #tpu.memory_space<vmem>>, vector<2x8xf32>
    tpu.vector_store %arg6[%c0_14, %c0_15], %27 {strides = array<i32>} : memref<2x8xf32, #tpu.memory_space<vmem>>, vector<2x8xf32>,
    return
  }
  func.func @transform_0(%arg0: i32) -> (i32, i32, i32) {
    %c0_i32 = arith.constant 0 : i32
    %c0_i32_0 = arith.constant 0 : i32
    %c0_i32_1 = arith.constant 0 : i32
    return %arg0, %c0_i32, %c0_i32_0 : i32, i32, i32
  }
  func.func @transform_1(%arg0: i32) -> (i32, i32) {
    %c0_i32 = arith.constant 0 : i32
    %c0_i32_0 = arith.constant 0 : i32
    return %arg0, %c0_i32 : i32, i32
  }
  func.func @transform_2(%arg0: i32) -> (i32, i32) {
    %c0_i32 = arith.constant 0 : i32
    %c0_i32_0 = arith.constant 0 : i32
    %c0_i32_1 = arith.constant 0 : i32
    return %c0_i32, %c0_i32_0 : i32, i32
  }
  func.func @transform_3(%arg0: i32) -> (i32, i32) {
    %c0_i32 = arith.constant 0 : i32
    %c0_i32_0 = arith.constant 0 : i32
    %c0_i32_1 = arith.constant 0 : i32
    return %c0_i32, %c0_i32_0 : i32, i32
  }
  func.func @transform_4(%arg0: i32) -> (i32, i32) {
    %c0_i32 = arith.constant 0 : i32
    %c0_i32_0 = arith.constant 0 : i32
    %c0_i32_1 = arith.constant 0 : i32
    return %c0_i32, %c0_i32_0 : i32, i32
  }
  func.func @transform_5(%arg0: i32) -> (i32, i32) {
    %c0_i32 = arith.constant 0 : i32
    %c0_i32_0 = arith.constant 0 : i32
    return %arg0, %c0_i32 : i32, i32
  }
}

</mosaic_0001>

<llo_original>
// kernel: tpu_custom_call.1
$region0: #{tpu_custom_call.1}
  #allocation0 [shape = 'u32[]', space=smem, size = 0x4, offset = 0x4, fixed_abs, tag = 'smem constant byte address 0x4 - core index']
  #allocation1 [shape = 'u32[144,128]{1,0:T(1,128)}', space=vmem, size = 0x12000, scoped, tag = 'internal scratch']
  #allocation2 [shape = 'f32[1,1]{1,0:T(1,128)S(6)}', space=smem, size = 0x200, scoped, tag = 'scoped memory for tpu_custom_call.1']
  %s0 = inlined_call_operand.hbm [shape: bf16[2,8,16], index: 0, kind: input, shape index: {}]
  %s1 = inlined_call_operand.vmem [shape: f32[2,32], index: 1, kind: input, shape index: {}]
  %s2 = inlined_call_operand.vmem [shape: bf16[16,32], index: 2, kind: input, shape index: {}]
  %s3 = inlined_call_operand.vmem [shape: f32[1,32], index: 3, kind: input, shape index: {}]
  %s4 = inlined_call_operand.<no memory space> [shape: f32[1,1], index: 4, kind: input, shape index: {}]
  %s5 = inlined_call_operand.hbm [shape: f32[2,8], index: 5, kind: output, shape index: {}]
  %s6 = sld [smem:[#allocation0]]
  $region34: #{tpu_custom_call.1} parent=0
    _
  %s8 = ssub.s32 1, %s6
  %s9 = scalar_select 0, %s8, %s6
  %10 = sst [smem:[#allocation2]] %s4
  $region1: #{tpu_custom_call.1} parent=0
    #allocation3 [shape = 'u8[4096]{0}', space=vmem, size = 0x1000, scoped, tag = 'input window, operand 0, single buffered']
    #allocation4 [shape = 's32[1]{0}', space=sflag, size = 0x4, scoped, tag = 'scoped memory for tpu_custom_call.1']
    #allocation5 [shape = 's32[1]{0}', space=sflag, size = 0x4, scoped, tag = 'scoped memory for tpu_custom_call.1']
    #allocation6 [shape = 'u8[1024]{0}', space=vmem, size = 0x400, scoped, tag = 'output window, operand 0, single buffered']
    %11 = vsyncpa [#allocation4], 0
    %12 = vsyncpa [#allocation5], 0
    // Predicated region
    $region2: #{tpu_custom_call.1} parent=1 // pred_check
      _
    $region3: #{tpu_custom_call.1} parent=1 // pred_check_branch
      %14 = sbr.rel (0) target = $region5
    $region4: #{tpu_custom_call.1} parent=1 // pred_region
      %s16 = ssub.s32 128, 128
      %17 = vsyncadd [#allocation4], %s16
      %s18 = sshll.u32 [#allocation3], 4
      %s19 = int_to_ptr.vmem [resolvable:$true] %s18
      %24 = dma.hbm_to_vmem [thread:$0]  %s0, 128, %s19, [#allocation4], 64, 64, 4
    $region5: #{tpu_custom_call.1} parent=1 // pred_fallthru
      _
    // Predicated region
    $region6: #{tpu_custom_call.1} parent=1 // pred_check
      _
    $region7: #{tpu_custom_call.1} parent=1 // pred_check_branch
      %26 = sbr.rel (0) target = $region9
    $region8: #{tpu_custom_call.1} parent=1 // pred_region
      _
    $region9: #{tpu_custom_call.1} parent=1 // pred_fallthru
      _
    // Predicated region
    $region10: #{tpu_custom_call.1} parent=1 // pred_check
      _
    $region11: #{tpu_custom_call.1} parent=1 // pred_check_branch
      %28 = sbr.rel (0) target = $region13
    $region12: #{tpu_custom_call.1} parent=1 // pred_region
      _
    $region13: #{tpu_custom_call.1} parent=1 // pred_fallthru
      _
    // Predicated region
    $region14: #{tpu_custom_call.1} parent=1 // pred_check
      _
    $region15: #{tpu_custom_call.1} parent=1 // pred_check_branch
      %30 = sbr.rel (0) target = $region17
    $region16: #{tpu_custom_call.1} parent=1 // pred_region
      _
    $region17: #{tpu_custom_call.1} parent=1 // pred_fallthru
      _
    // Predicated region
    $region18: #{tpu_custom_call.1} parent=1 // pred_check
      _
    $region19: #{tpu_custom_call.1} parent=1 // pred_check_branch
      %32 = sbr.rel (0) target = $region21
    $region20: #{tpu_custom_call.1} parent=1 // pred_region
      _
    $region21: #{tpu_custom_call.1} parent=1 // pred_fallthru
      _
    // Predicated region
    $region22: #{tpu_custom_call.1} parent=1 // pred_check
      _
    $region23: #{tpu_custom_call.1} parent=1 // pred_check_branch
      %34 = sbr.rel (0) target = $region25
    $region24: #{tpu_custom_call.1} parent=1 // pred_region
      %35 = dma.done [#allocation4], 128
    $region25: #{tpu_custom_call.1} parent=1 // pred_fallthru
      _
    %v37 = vld [vmem:[#allocation3] sm:$0xf]
    %v38 = vld [vmem:[#allocation3 + $0x4] sm:$0xf]
    %v39 = vld [vmem:[%s2] sm:$0xf]
    %v40 = vld [vmem:[%s2 + $0x4] sm:$0xf]
    %v43 = vunpack.c.l.b16 %v37
    %v44 = vunpack.c.l.b16 %v38
    %v45 = vpack.c.b16 %v44, %v43
    %v48 = vunpack.c.l.b16 %v39
    %v49 = vunpack.c.l.b16 %v40
    %v50 = vpack.c.b16 %v49, %v48
    %vm52 = vcmask 130048
    %v54 = vsel %vm52, %v45, 0
    %56 = vmatprep.subr.bf16.mxu0 0
    %57 = vmatpush1.bf16.msra.mxu0 %v50
    %58 = vmatprep.subr.bf16.mxu0 0
    %59 = vmatpush1.bf16.msra.mxu0 0
    %60 = vmatprep.subr.bf16.mxu0 0
    %61 = vmatpush1.bf16.msra.mxu0 0
    %62 = vmatprep.subr.bf16.mxu0 0
    %63 = vmatpush1.bf16.msra.mxu0 0
    %64 = vmatprep.subr.bf16.mxu0 0
    %65 = vmatpush1.bf16.msra.mxu0 0
    %66 = vmatprep.subr.bf16.mxu0 0
    %67 = vmatpush1.bf16.msra.mxu0 0
    %68 = vmatprep.subr.bf16.mxu0 0
    %69 = vmatpush1.bf16.msra.mxu0 0
    %70 = vmatprep.subr.bf16.mxu0 0
    %71 = vmatpush1.bf16.msra.mxu0 0
    %72 = vmatprep.subr.bf16.mxu0 0
    %73 = vmatpush1.bf16.msra.mxu0 0
    %74 = vmatprep.subr.bf16.mxu0 0
    %75 = vmatpush1.bf16.msra.mxu0 0
    %76 = vmatprep.subr.bf16.mxu0 0
    %77 = vmatpush1.bf16.msra.mxu0 0
    %78 = vmatprep.subr.bf16.mxu0 0
    %79 = vmatpush1.bf16.msra.mxu0 0
    %80 = vmatprep.subr.bf16.mxu0 0
    %81 = vmatpush1.bf16.msra.mxu0 0
    %82 = vmatprep.subr.bf16.mxu0 0
    %83 = vmatpush1.bf16.msra.mxu0 0
    %84 = vmatprep.subr.bf16.mxu0 0
    %85 = vmatpush1.bf16.msra.mxu0 0
    %86 = vmatprep.subr.bf16.mxu0 0
    %87 = vmatpush1.bf16.msra.mxu0 0
    %88 = vmatprep.mubr.bf16.mxu0 0
    %89 = vmatmul.mubr.bf16.gmra.mrb[0].mxu0 %v54
    %v90 = vpop.f32.mrb[0].mxu0
    %v91 = vadd.f32 0.0, %v90
    %v92 = vpop.f32.mrb[0].mxu0
    %v93 = vpop.f32.mrb[0].mxu0
    %v94 = vadd.f32 0.0, %v93
    %v95 = vpop.f32.mrb[0].mxu0
    %96 = vdwg.mxu0
    %v97 = vld [vmem:[%s1] sm:$0x3]
    %v100 = vunpack.c.l.s4 1966171168
    %v101 = vunpack.c.0.s8 %v100
    %v102 = vlaneseq
    %v103 = vshrl.u32 %v102, 7
    %v104 = vsub.s32 %v101, %v103
    %v105 = vrot.slane %v97, %v104
    %v106 = vcombine.high %v105, %v105
    %v108 = vunpack.c.l.s4 1966171168
    %v109 = vunpack.c.0.s8 %v108
    %v110 = vlaneseq
    %v111 = vshrl.u32 %v110, 7
    %v112 = vsub.s32 %v109, %v111
    %v113 = vrot.slane %v105, %v112
    %v115 = vunpack.c.l.s4 1966171168
    %v116 = vunpack.c.0.s8 %v115
    %v117 = vlaneseq
    %v118 = vshrl.u32 %v117, 7
    %v119 = vsub.s32 %v116, %v118
    %v120 = vrot.slane %v106, %v119
    %v121 = vlaneseq
    %v122 = vshrl.u32 %v121, 7
    %v123 = vsub.s32 0, %v122
    %v124 = vrot.slane %v113, %v123
    %v125 = vlaneseq
    %v126 = vshrl.u32 %v125, 7
    %v127 = vsub.s32 0, %v126
    %v128 = vrot.slane %v120, %v127
    %v131 = vadd.f32 %v91, %v124
    %v132 = vadd.f32 %v94, %v128
    %v133 = vmax.f32 %v131, 0.0
    %v134 = vmax.f32 %v132, 0.0
    %v135 = vld [vmem:[%s3] sm:$0x1]
    %v137 = vlaneseq
    %v138 = vshrl.u32 %v137, 7
    %v139 = vsub.s32 0, %v138
    %v140 = vrot.slane %v135, %v139
    %v142 = vmul.f32 %v133, %v140
    %v143 = vmul.f32 %v134, %v140
    %vm144 = vcmask 261120
    %v145 = vsel %vm144, %v142, 0.0
    %146 = vadd.xlane.f32.xlu0 %v145
    %v147 = vpop.xlane.xlu0 %146
    %v148 = vsel %vm144, %v143, 0.0
    %149 = vadd.xlane.f32.xlu0 %v148
    %v150 = vpop.xlane.xlu0 %149
    %s151 = sld [smem:[#allocation2]]
    %v152 = vstv %s151
    %v153 = vadd.f32 %v147, %v152
    %v154 = vadd.f32 %v150, %v152
    %v157 = vlaneseq
    %v158 = vand.u32 %v157, 127
    %v159 = vlaneseq
    %v160 = vshrl.u32 %v159, 7
    %v161 = vsub.s32 %v158, %v160
    %v162 = vrot.slane %v153, %v161
    %v163 = vlaneseq
    %v164 = vshrl.u32 %v163, 7
    %v165 = vsub.s32 %v158, %v164
    %v166 = vrot.slane %v154, %v165
    %vm167 = vcmask 1041409
    %v168 = vsel %vm167, %v166, %v162
    %vm170 = vcmask 58368
    %v171 = vsel %vm170, %v168, -inf
    %172 = vmax.xlane.f32.xlu0 %v171
    %v173 = vpop.xlane.xlu0 %172
    %v175 = vlaneseq
    %v176 = vshrl.u32 %v175, 7
    %v177 = vsub.s32 0, %v176
    %v178 = vrot.slane %v173, %v177
    %v179 = vlaneseq
    %v180 = vshrl.u32 %v179, 7
    %v181 = vsub.s32 1, %v180
    %v182 = vrot.slane %v173, %v181
    %v185 = vsub.f32 %v153, %v178
    %v186 = vsub.f32 %v154, %v182
    %v187 = vmul.f32 %v185, 1.442695
    %v188 = vpow.pop %v187
    %v189 = vmul.f32 %v186, 1.442695
    %v190 = vpow.pop %v189
    %193 = vset.pattern.permute.xlu0 0
    %194 = vperm.xlu0 %193, %v188
    %v195 = vpop.permute.xlu0 %194
    %196 = vset.pattern.permute.xlu0 0
    %197 = vperm.xlu0 %196, %v190
    %v198 = vpop.permute.xlu0 %197
    %v199 = vlaneseq
    %v200 = vshrl.u32 %v199, 7
    %v201 = vsub.s32 %v158, %v200
    %v202 = vrot.slane %v195, %v201
    %v203 = vlaneseq
    %v204 = vshrl.u32 %v203, 7
    %v205 = vsub.s32 %v158, %v204
    %v206 = vrot.slane %v198, %v205
    %v207 = vsel %vm167, %v206, %v202
    %v209 = vsel %vm170, %v207, 0.0
    %210 = vadd.xlane.f32.xlu0 %v209
    %v211 = vpop.xlane.xlu0 %210
    %v213 = vlaneseq
    %v214 = vshrl.u32 %v213, 7
    %v215 = vsub.s32 0, %v214
    %v216 = vrot.slane %v211, %v215
    %v217 = vlaneseq
    %v218 = vshrl.u32 %v217, 7
    %v219 = vsub.s32 1, %v218
    %v220 = vrot.slane %v211, %v219
    %v223 = vrcp.pop %v216
    %v224 = vmul.f32 %v188, %v223
    %v225 = vrcp.pop %v220
    %v226 = vmul.f32 %v190, %v225
    %229 = vset.pattern.permute.xlu0 0
    %230 = vperm.xlu0 %229, %v224
    %v231 = vpop.permute.xlu0 %230
    %232 = vset.pattern.permute.xlu0 0
    %233 = vperm.xlu0 %232, %v226
    %v234 = vpop.permute.xlu0 %233
    %v235 = vlaneseq
    %v236 = vshrl.u32 %v235, 7
    %v237 = vsub.s32 %v158, %v236
    %v238 = vrot.slane %v231, %v237
    %v239 = vlaneseq
    %v240 = vshrl.u32 %v239, 7
    %v241 = vsub.s32 %v158, %v240
    %v242 = vrot.slane %v234, %v241
    %v243 = vsel %vm167, %v242, %v238
    %245 = vst.msk [vmem:[#allocation6] sm:$0x3] %vm170, %v243
    // Predicated region
    $region26: #{tpu_custom_call.1} parent=1 // pred_check
      _
    $region27: #{tpu_custom_call.1} parent=1 // pred_check_branch
      %247 = sbr.rel (0) target = $region29
    $region28: #{tpu_custom_call.1} parent=1 // pred_region
      %s249 = ssub.s32 32, 32
      %250 = vsyncadd [#allocation5], %s249
      %s252 = sshll.u32 [#allocation6], 4
      %s253 = int_to_ptr.vmem [resolvable:$true] %s252
      %255 = dma.vmem_to_hbm [thread:$0]  %s253, 32, %s5, [#allocation5]
    $region29: #{tpu_custom_call.1} parent=1 // pred_fallthru
      _
    // Predicated region
    $region30: #{tpu_custom_call.1} parent=1 // pred_check
      _
    $region31: #{tpu_custom_call.1} parent=1 // pred_check_branch
      %257 = sbr.rel (0) target = $region33
    $region32: #{tpu_custom_call.1} parent=1 // pred_region
      %258 = dma.done [#allocation5], 32
    $region33: #{tpu_custom_call.1} parent=1 // pred_fallthru
      _
    %259 = vsyncpa [#allocation4], 1
    %260 = vsyncpa [#allocation5], 1

</llo_original>
